<compile_context>
chip_gen: v7x
topology: tpu7x:2x2x1
jax: 0.10.0
libtpu: 0.0.40
codegen_flags: <defaults>
</compile_context>

<pallas_src>
import jax
import jax.numpy as jnp
from jax.experimental import pallas as pl
from jax.experimental.pallas import tpu as pltpu


def _round_up(x, m):
    return ((x + m - 1) // m) * m


def _vmem_budget_bytes(tile, h_pad, d_in, d_out, itemsize=4):
    """Right-sized VMEM request: double-buffered streaming tiles (x, out) +
    weight buffers + live f32 intermediates + headroom, clamped to <=48 MiB
    so it is safe on v7x (64 MiB physical VMEM per TensorCore)."""
    stream = 2 * (d_in * tile + d_out * tile) * itemsize      # x & out, 2 bufs each
    weights = 2 * (h_pad * d_in + h_pad + h_pad * d_out + d_out) * itemsize
    interm = 4 * h_pad * tile * 4                             # h, y1, dot result (f32)
    est = stream + weights + interm + (4 << 20)               # compiler-scratch headroom
    return int(min(max(est, 8 << 20), 48 << 20))


# ---------------------------------------------------------------------------
# Kernel A: "batch-on-lanes" layout, used when D_in == 1 (the module's shape).
#   xT:  (1, tile_n)        w1c: (H_pad, 1)   b1c: (H_pad, 1)
#   w2t: (D_out, H_pad)     b2c: (D_out, 1)   out: (D_out, tile_n)
# ---------------------------------------------------------------------------
def _mlp_sig_kernel_batch_on_lanes(xT_ref, w1c_ref, b1c_ref, w2t_ref, b2c_ref,
                                   o_ref):
    xT = xT_ref[...].astype(jnp.float32)          # (1, tile_n)
    w1c = w1c_ref[...].astype(jnp.float32)        # (H_pad, 1)
    b1c = b1c_ref[...].astype(jnp.float32)        # (H_pad, 1)

    # D_in == 1: Linear1 is an outer product -> VPU broadcast-multiply,
    # h laid out as (H_pad, tile_n) so the batch dim is lane-dense.
    h = w1c * xT + b1c

    # sigmoid via tanh: one EUP transcendental per element, no f32 divide.
    y1 = 0.5 * (jnp.tanh(0.5 * h) + 1.0)

    # Linear2: (D_out, H_pad) @ (H_pad, tile_n) -> (D_out, tile_n).
    # NOTE(correctness): padded hidden rows give y1 = sigmoid(0) = 0.5; the
    # matching COLUMNS of w2t are exactly zero (enforced in prepare_params),
    # so they contribute 0 to the output.
    y = jnp.dot(w2t_ref[...].astype(jnp.float32), y1,
                preferred_element_type=jnp.float32)
    y = y + b2c_ref[...].astype(jnp.float32)      # (D_out, 1) broadcast over lanes
    o_ref[...] = y.astype(o_ref.dtype)


# ---------------------------------------------------------------------------
# Kernel B: general layout (batch on sublanes), used when D_in > 1.
#   x: (tile_n, D_in)  w1: (D_in, H_pad)  b1: (1, H_pad)
#   w2: (H_pad, D_out) b2: (1, D_out)     out: (tile_n, D_out)  (no D_out pad)
# ---------------------------------------------------------------------------
def _mlp_sig_kernel_batch_on_sublanes(x_ref, w1_ref, b1_ref, w2_ref, b2_ref,
                                      o_ref):
    x = x_ref[...].astype(jnp.float32)
    h = jnp.dot(x, w1_ref[...].astype(jnp.float32),
                preferred_element_type=jnp.float32) + b1_ref[...]
    y1 = 0.5 * (jnp.tanh(0.5 * h) + 1.0)
    # NOTE(correctness): padded hidden columns give y1 = 0.5; the matching
    # ROWS of w2 are exactly zero (enforced in prepare_params).
    y = jnp.dot(y1, w2_ref[...].astype(jnp.float32),
                preferred_element_type=jnp.float32) + b2_ref[...]
    o_ref[...] = y.astype(o_ref.dtype)


def prepare_params(w1, b1, w2, b2):
    """Pad / layout-flip the weights ONCE (not per forward call).

    w1: (D_in, H); b1: (H,); w2: (H, D_out); b2: (D_out,), stored in
    (in_features, out_features) layout (transpose of nn.Linear.weight).
    """
    d_in, h = w1.shape
    d_out = w2.shape[1]
    if d_in == 1:
        # Batch-on-lanes layout.  H only needs sublane (8) alignment.
        h_pad = _round_up(h, 8)
        w1c = jnp.zeros((h_pad, 1), w1.dtype).at[:h, 0].set(w1[0, :])
        b1c = jnp.zeros((h_pad, 1), b1.dtype).at[:h, 0].set(b1)
        # Padded hidden units: h=0 -> sigmoid(0)=0.5; their w2 entries MUST
        # stay exactly zero for correctness.
        w2t = jnp.zeros((d_out, h_pad), w2.dtype).at[:, :h].set(w2.T)
        b2c = b2.reshape(d_out, 1)
        return dict(kind="lanes", d_in=d_in, h=h, h_pad=h_pad, d_out=d_out,
                    params=(w1c, b1c, w2t, b2c))
    else:
        # General layout.  Pad H to a lane multiple for dense intermediates;
        # D_out is NOT padded (output block last dim == full array dim).
        h_pad = _round_up(h, 128)
        w1p = jnp.zeros((d_in, h_pad), w1.dtype).at[:, :h].set(w1)
        b1p = jnp.zeros((1, h_pad), b1.dtype).at[0, :h].set(b1)
        w2p = jnp.zeros((h_pad, d_out), w2.dtype).at[:h, :].set(w2)
        b2p = b2.reshape(1, d_out)
        return dict(kind="sublanes", d_in=d_in, h=h, h_pad=h_pad, d_out=d_out,
                    params=(w1p, b1p, w2p, b2p))


def net_sig_forward(x, prepared, *, tile_n=2048):
    """Forward pass of Net_sig: sigmoid(x @ w1 + b1) @ w2 + b2."""
    n, d_in = x.shape
    assert d_in == prepared["d_in"]
    d_out = prepared["d_out"]
    h_pad = prepared["h_pad"]
    dtype = x.dtype

    if prepared["kind"] == "lanes":
        w1c, b1c, w2t, b2c = prepared["params"]
        lane = 128
        tile = _round_up(min(tile_n, max(n, 1)), lane)
        n_pad = _round_up(n, tile)
        # Keep >=2 grid steps when the batch is big enough so the "parallel"
        # axis can shard across v7x's two TensorCores (toy N stays 1 step).
        if n_pad // tile < 2 and n > 2 * lane:
            tile = _round_up(pl.cdiv(n, 2), lane)
            n_pad = _round_up(n, tile)
        xT = jnp.zeros((1, n_pad), dtype).at[0, :n].set(x[:, 0])
        grid = (n_pad // tile,)

        out_p = pl.pallas_call(
            _mlp_sig_kernel_batch_on_lanes,
            out_shape=jax.ShapeDtypeStruct((d_out, n_pad), dtype),
            grid=grid,
            in_specs=[
                pl.BlockSpec((1, tile), lambda i: (0, i)),
                # Constant index maps: weights DMA'd once, VMEM-resident.
                pl.BlockSpec((h_pad, 1), lambda i: (0, 0)),
                pl.BlockSpec((h_pad, 1), lambda i: (0, 0)),
                pl.BlockSpec((d_out, h_pad), lambda i: (0, 0)),
                pl.BlockSpec((d_out, 1), lambda i: (0, 0)),
            ],
            out_specs=pl.BlockSpec((d_out, tile), lambda i: (0, i)),
            compiler_params=pltpu.CompilerParams(
                dimension_semantics=("parallel",),
                vmem_limit_bytes=_vmem_budget_bytes(tile, h_pad, 1, d_out),
            ),
        )(xT, w1c, b1c, w2t, b2c)
        # (D_out, n_pad) -> (n, D_out): free reshape for a column-vector output.
        return out_p[:, :n].T

    else:
        w1p, b1p, w2p, b2p = prepared["params"]
        tile = _round_up(min(tile_n, max(n, 8)), 8)
        n_pad = _round_up(n, tile)
        if n_pad // tile < 2 and n > 16:
            tile = _round_up(pl.cdiv(n, 2), 8)
            n_pad = _round_up(n, tile)
        x_p = x if n_pad == n else jnp.zeros((n_pad, d_in), dtype).at[:n].set(x)
        grid = (n_pad // tile,)

        out_p = pl.pallas_call(
            _mlp_sig_kernel_batch_on_sublanes,
            out_shape=jax.ShapeDtypeStruct((n_pad, d_out), dtype),
            grid=grid,
            in_specs=[
                pl.BlockSpec((tile, d_in), lambda i: (i, 0)),
                pl.BlockSpec((d_in, h_pad), lambda i: (0, 0)),
                pl.BlockSpec((1, h_pad), lambda i: (0, 0)),
                pl.BlockSpec((h_pad, d_out), lambda i: (0, 0)),
                pl.BlockSpec((1, d_out), lambda i: (0, 0)),
            ],
            out_specs=pl.BlockSpec((tile, d_out), lambda i: (i, 0)),
            compiler_params=pltpu.CompilerParams(
                dimension_semantics=("parallel",),
                vmem_limit_bytes=_vmem_budget_bytes(tile, h_pad, d_in, d_out),
            ),
        )(x_p, w1p, b1p, w2p, b2p)
        return out_p[:n, :d_out]


def init_params(key, d_in, h, d_out, dtype=jnp.float32):
    """Deterministic init mimicking nn.Linear's U(-1/sqrt(fan_in), ...)."""
    k1, k2, k3, k4 = jax.random.split(key, 4)
    bound1 = 1.0 / (d_in ** 0.5)
    bound2 = 1.0 / (h ** 0.5)
    w1 = jax.random.uniform(k1, (d_in, h), dtype, minval=-bound1, maxval=bound1)
    b1 = jax.random.uniform(k2, (h,), dtype, minval=-bound1, maxval=bound1)
    w2 = jax.random.uniform(k3, (h, d_out), dtype, minval=-bound2, maxval=bound2)
    b2 = jax.random.uniform(k4, (d_out,), dtype, minval=-bound2, maxval=bound2)
    return w1, b1, w2, b2


def _ref_forward(x, w1, b1, w2, b2):
    return (1.0 / (1.0 + jnp.exp(-(x @ w1 + b1)))) @ w2 + b2


if __name__ == "__main__":
    key = jax.random.PRNGKey(0)

    # --- module's actual shape: x = torch.arange(-2, 2, 0.1).view(-1, 1) ----
    D_in, H, D_out = 1, 32, 1
    w1, b1, w2, b2 = init_params(key, D_in, H, D_out)
    prepared = prepare_params(w1, b1, w2, b2)          # pad / flip layout ONCE
    x = jnp.arange(-2.0, 2.0, 0.1, dtype=jnp.float32).reshape(-1, 1)  # (40, 1)

    out = net_sig_forward(x, prepared)                 # toy N=40 -> single grid step
    out = jax.block_until_ready(out)
    ref = _ref_forward(x, w1, b1, w2, b2)
    assert out.shape == (x.shape[0], D_out)
    assert jnp.allclose(out, ref, atol=1e-4, rtol=1e-4)

    # --- also exercise the general (D_in > 1) path at a small shape ---------
    D_in2, H2, D_out2 = 4, 32, 3
    w1b, b1b, w2b, b2b = init_params(jax.random.PRNGKey(1), D_in2, H2, D_out2)
    prepared2 = prepare_params(w1b, b1b, w2b, b2b)
    x2 = jax.random.normal(jax.random.PRNGKey(2), (40, D_in2), jnp.float32)
    out2 = jax.block_until_ready(net_sig_forward(x2, prepared2))
    ref2 = _ref_forward(x2, w1b, b1b, w2b, b2b)
    assert out2.shape == (40, D_out2)
    assert jnp.allclose(out2, ref2, atol=1e-4, rtol=1e-4)

    print("KERNEL_OK")
</pallas_src>

<mosaic_0001>
module attributes {stable_mosaic.version = 11 : i64} {
  func.func @_mlp_sig_kernel_batch_on_lanes(%arg0: i32, %arg1: memref<1x128xf32, #tpu.memory_space<vmem>>, %arg2: memref<32x1xf32, #tpu.memory_space<vmem>>, %arg3: memref<32x1xf32, #tpu.memory_space<vmem>>, %arg4: memref<1x32xf32, #tpu.memory_space<vmem>>, %arg5: memref<1x1xf32, #tpu.memory_space<vmem>>, %arg6: memref<1x128xf32, #tpu.memory_space<vmem>>) attributes {dimension_semantics = [#tpu.dimension_semantics<parallel>], iteration_bounds = array<i64: 1>, scalar_prefetch = 0 : i64, scratch_operands = 0 : i64, tpu.core_type = #tpu.core_type<tc>, window_params = [{transform_indices = @transform_0, window_bounds = array<i64: 1, 128>}, {pipeline_mode = #tpu.pipeline_mode<synchronous>, transform_indices = @transform_1, window_bounds = array<i64: 32, 1>}, {pipeline_mode = #tpu.pipeline_mode<synchronous>, transform_indices = @transform_2, window_bounds = array<i64: 32, 1>}, {pipeline_mode = #tpu.pipeline_mode<synchronous>, transform_indices = @transform_3, window_bounds = array<i64: 1, 32>}, {pipeline_mode = #tpu.pipeline_mode<synchronous>, transform_indices = @transform_4, window_bounds = array<i64: 1, 1>}, {transform_indices = @transform_5, window_bounds = array<i64: 1, 128>}]} {
    %c0 = arith.constant 0 : index
    %c0_0 = arith.constant 0 : index
    %0 = vector.load %arg1[%c0, %c0_0] : memref<1x128xf32, #tpu.memory_space<vmem>>, vector<1x128xf32>
    %c0_1 = arith.constant 0 : index
    %c0_2 = arith.constant 0 : index
    %1 = vector.load %arg2[%c0_1, %c0_2] : memref<32x1xf32, #tpu.memory_space<vmem>>, vector<32x1xf32>
    %c0_3 = arith.constant 0 : index
    %c0_4 = arith.constant 0 : index
    %2 = vector.load %arg3[%c0_3, %c0_4] : memref<32x1xf32, #tpu.memory_space<vmem>>, vector<32x1xf32>
    %3 = vector.broadcast %1 : vector<32x1xf32> to vector<32x128xf32>
    %4 = vector.broadcast %0 : vector<1x128xf32> to vector<32x128xf32>
    %5 = arith.mulf %3, %4 : vector<32x128xf32>
    %6 = vector.broadcast %2 : vector<32x1xf32> to vector<32x128xf32>
    %7 = arith.addf %5, %6 : vector<32x128xf32>
    %cst = arith.constant 5.000000e-01 : f32
    %8 = vector.broadcast %cst : f32 to vector<32x128xf32>
    %9 = arith.mulf %8, %7 : vector<32x128xf32>
    %10 = math.tanh %9 : vector<32x128xf32>
    %cst_5 = arith.constant 1.000000e+00 : f32
    %11 = vector.broadcast %cst_5 : f32 to vector<32x128xf32>
    %12 = arith.addf %10, %11 : vector<32x128xf32>
    %cst_6 = arith.constant 5.000000e-01 : f32
    %13 = vector.broadcast %cst_6 : f32 to vector<32x128xf32>
    %14 = arith.mulf %13, %12 : vector<32x128xf32>
    %c0_7 = arith.constant 0 : index
    %c0_8 = arith.constant 0 : index
    %15 = vector.load %arg4[%c0_7, %c0_8] : memref<1x32xf32, #tpu.memory_space<vmem>>, vector<1x32xf32>
    %cst_9 = arith.constant dense<0.000000e+00> : vector<1x128xf32>
    %16 = tpu.matmul %15, %14, %cst_9 {dimension_numbers = #tpu.dot_dimension_numbers<[1], [0], [0], [1], [0, 0, 1, 1], [], []>} : vector<1x32xf32>, vector<32x128xf32>, vector<1x128xf32> -> vector<1x128xf32>
    %c0_10 = arith.constant 0 : index
    %c0_11 = arith.constant 0 : index
    %17 = vector.load %arg5[%c0_10, %c0_11] : memref<1x1xf32, #tpu.memory_space<vmem>>, vector<1x1xf32>
    %18 = vector.broadcast %17 : vector<1x1xf32> to vector<1x128xf32>
    %19 = arith.addf %16, %18 : vector<1x128xf32>
    %c0_12 = arith.constant 0 : index
    %c0_13 = arith.constant 0 : index
    %20 = vector.load %arg6[%c0_12, %c0_13] : memref<1x128xf32, #tpu.memory_space<vmem>>, vector<1x128xf32>
    tpu.vector_store %arg6[%c0_12, %c0_13], %19 {strides = array<i32>} : memref<1x128xf32, #tpu.memory_space<vmem>>, vector<1x128xf32>,
    return
  }
  func.func @transform_0(%arg0: i32) -> (i32, i32) {
    %c0_i32 = arith.constant 0 : i32
    %c0_i32_0 = arith.constant 0 : i32
    return %c0_i32, %arg0 : i32, i32
  }
  func.func @transform_1(%arg0: i32) -> (i32, i32) {
    %c0_i32 = arith.constant 0 : i32
    %c0_i32_0 = arith.constant 0 : i32
    %c0_i32_1 = arith.constant 0 : i32
    return %c0_i32, %c0_i32_0 : i32, i32
  }
  func.func @transform_2(%arg0: i32) -> (i32, i32) {
    %c0_i32 = arith.constant 0 : i32
    %c0_i32_0 = arith.constant 0 : i32
    %c0_i32_1 = arith.constant 0 : i32
    return %c0_i32, %c0_i32_0 : i32, i32
  }
  func.func @transform_3(%arg0: i32) -> (i32, i32) {
    %c0_i32 = arith.constant 0 : i32
    %c0_i32_0 = arith.constant 0 : i32
    %c0_i32_1 = arith.constant 0 : i32
    return %c0_i32, %c0_i32_0 : i32, i32
  }
  func.func @transform_4(%arg0: i32) -> (i32, i32) {
    %c0_i32 = arith.constant 0 : i32
    %c0_i32_0 = arith.constant 0 : i32
    %c0_i32_1 = arith.constant 0 : i32
    return %c0_i32, %c0_i32_0 : i32, i32
  }
  func.func @transform_5(%arg0: i32) -> (i32, i32) {
    %c0_i32 = arith.constant 0 : i32
    %c0_i32_0 = arith.constant 0 : i32
    return %c0_i32, %arg0 : i32, i32
  }
}

</mosaic_0001>

<llo_original>
// kernel: tpu_custom_call.1
$region0: #{tpu_custom_call.1}
  #allocation0 [shape = 'u32[]', space=smem, size = 0x4, offset = 0x4, fixed_abs, tag = 'smem constant byte address 0x4 - core index']
  #allocation1 [shape = 'u32[144,128]{1,0:T(1,128)}', space=vmem, size = 0x12000, scoped, tag = 'internal scratch']
  #allocation2 [shape = 'f32[1,1]{1,0:T(1,128)S(1)}', space=vmem, size = 0x200, scoped, tag = 'scoped memory for tpu_custom_call.1']
  %s0 = inlined_call_operand.vmem [shape: f32[1,128], index: 0, kind: input, shape index: {}]
  %s1 = inlined_call_operand.vmem [shape: f32[32,1], index: 1, kind: input, shape index: {}]
  %s2 = inlined_call_operand.vmem [shape: f32[32,1], index: 2, kind: input, shape index: {}]
  %s3 = inlined_call_operand.vmem [shape: f32[1,32], index: 3, kind: input, shape index: {}]
  %s4 = inlined_call_operand.<no memory space> [shape: f32[1,1], index: 4, kind: input, shape index: {}]
  %s5 = inlined_call_operand.hbm [shape: f32[1,128], index: 5, kind: output, shape index: {}]
  %s6 = sld [smem:[#allocation0]]
  $region30: #{tpu_custom_call.1} parent=0
    _
  %s8 = ssub.s32 1, %s6
  %s9 = scalar_select 0, %s8, %s6
  %v10 = vstv %s4
  %11 = vst [vmem:[#allocation2] sm:$0x1] %v10
  $region1: #{tpu_custom_call.1} parent=0
    #allocation3 [shape = 'u8[512]{0}', space=vmem, size = 0x400, scoped, tag = 'output window, operand 0, single buffered']
    #allocation4 [shape = 's32[1]{0}', space=sflag, size = 0x4, scoped, tag = 'scoped memory for tpu_custom_call.1']
    %12 = vsyncpa [#allocation4], 0
    // Predicated region
    $region2: #{tpu_custom_call.1} parent=1 // pred_check
      _
    $region3: #{tpu_custom_call.1} parent=1 // pred_check_branch
      %14 = sbr.rel (0) target = $region5
    $region4: #{tpu_custom_call.1} parent=1 // pred_region
      _
    $region5: #{tpu_custom_call.1} parent=1 // pred_fallthru
      _
    // Predicated region
    $region6: #{tpu_custom_call.1} parent=1 // pred_check
      _
    $region7: #{tpu_custom_call.1} parent=1 // pred_check_branch
      %16 = sbr.rel (0) target = $region9
    $region8: #{tpu_custom_call.1} parent=1 // pred_region
      _
    $region9: #{tpu_custom_call.1} parent=1 // pred_fallthru
      _
    // Predicated region
    $region10: #{tpu_custom_call.1} parent=1 // pred_check
      _
    $region11: #{tpu_custom_call.1} parent=1 // pred_check_branch
      %18 = sbr.rel (0) target = $region13
    $region12: #{tpu_custom_call.1} parent=1 // pred_region
      _
    $region13: #{tpu_custom_call.1} parent=1 // pred_fallthru
      _
    // Predicated region
    $region14: #{tpu_custom_call.1} parent=1 // pred_check
      _
    $region15: #{tpu_custom_call.1} parent=1 // pred_check_branch
      %20 = sbr.rel (0) target = $region17
    $region16: #{tpu_custom_call.1} parent=1 // pred_region
      _
    $region17: #{tpu_custom_call.1} parent=1 // pred_fallthru
      _
    // Predicated region
    $region18: #{tpu_custom_call.1} parent=1 // pred_check
      _
    $region19: #{tpu_custom_call.1} parent=1 // pred_check_branch
      %22 = sbr.rel (0) target = $region21
    $region20: #{tpu_custom_call.1} parent=1 // pred_region
      _
    $region21: #{tpu_custom_call.1} parent=1 // pred_fallthru
      _
    %v23 = vld [vmem:[%s0] sm:$0x1]
    %v24 = vld [vmem:[%s1] sm:$0xff]
    %v25 = vld [vmem:[%s1 + $0x8] sm:$0xff]
    %v26 = vld [vmem:[%s1 + $0x10] sm:$0xff]
    %v27 = vld [vmem:[%s1 + $0x18] sm:$0xff]
    %v28 = vld [vmem:[%s2] sm:$0xff]
    %v29 = vld [vmem:[%s2 + $0x8] sm:$0xff]
    %v30 = vld [vmem:[%s2 + $0x10] sm:$0xff]
    %v31 = vld [vmem:[%s2 + $0x18] sm:$0xff]
    %33 = vset.pattern.permute.xlu0 0
    %34 = vperm.xlu0 %33, %v24
    %v35 = vpop.permute.xlu0 %34
    %38 = vset.pattern.permute.xlu0 0
    %39 = vperm.xlu0 %38, %v25
    %v40 = vpop.permute.xlu0 %39
    %43 = vset.pattern.permute.xlu0 0
    %44 = vperm.xlu0 %43, %v26
    %v45 = vpop.permute.xlu0 %44
    %48 = vset.pattern.permute.xlu0 0
    %49 = vperm.xlu0 %48, %v27
    %v50 = vpop.permute.xlu0 %49
    %v53 = vlaneseq
    %v54 = vshrl.u32 %v53, 7
    %v55 = vsub.s32 0, %v54
    %v56 = vrot.slane %v23, %v55
    %v58 = vmul.f32 %v35, %v56
    %v59 = vmul.f32 %v40, %v56
    %v60 = vmul.f32 %v45, %v56
    %v61 = vmul.f32 %v50, %v56
    %63 = vset.pattern.permute.xlu0 0
    %64 = vperm.xlu0 %63, %v28
    %v65 = vpop.permute.xlu0 %64
    %68 = vset.pattern.permute.xlu0 0
    %69 = vperm.xlu0 %68, %v29
    %v70 = vpop.permute.xlu0 %69
    %73 = vset.pattern.permute.xlu0 0
    %74 = vperm.xlu0 %73, %v30
    %v75 = vpop.permute.xlu0 %74
    %78 = vset.pattern.permute.xlu0 0
    %79 = vperm.xlu0 %78, %v31
    %v80 = vpop.permute.xlu0 %79
    %v82 = vadd.f32 %v58, %v65
    %v83 = vadd.f32 %v59, %v70
    %v84 = vadd.f32 %v60, %v75
    %v85 = vadd.f32 %v61, %v80
    %v86 = vmul.f32 %v82, 0.5
    %v87 = vmul.f32 %v83, 0.5
    %v88 = vmul.f32 %v84, 0.5
    %v89 = vmul.f32 %v85, 0.5
    %v90 = vtanh.pop %v86
    %v91 = vtanh.pop %v87
    %v92 = vtanh.pop %v88
    %v93 = vtanh.pop %v89
    %v94 = vadd.f32 %v90, 1.0
    %v95 = vadd.f32 %v91, 1.0
    %v96 = vadd.f32 %v92, 1.0
    %v97 = vadd.f32 %v93, 1.0
    %v98 = vmul.f32 %v94, 0.5
    %v99 = vmul.f32 %v95, 0.5
    %v100 = vmul.f32 %v96, 0.5
    %v101 = vmul.f32 %v97, 0.5
    %v102 = vld [vmem:[%s3] sm:$0x1]
    %v103 = vld [vmem:[#allocation2] sm:$0x1]
    %105 = vset.pattern.permute.xlu0 0
    %106 = vperm.xlu0 %105, %v103
    %v107 = vpop.permute.xlu0 %106
    %v109 = vlaneseq
    %v110 = vshrl.u32 %v109, 7
    %v111 = vsub.s32 0, %v110
    %v112 = vrot.slane %v107, %v111
    %vm113 = vcmask 261120
    %v115 = vsel %vm113, %v102, 0
    %117 = vmatprep.subr.mxu0 0.0
    %118 = vmatpush1.msra.mxu0 %v98
    %119 = vmatprep.subr.mxu0 0.0
    %120 = vmatpush1.msra.mxu0 %v99
    %121 = vmatprep.subr.mxu0 0.0
    %122 = vmatpush1.msra.mxu0 %v100
    %123 = vmatprep.subr.mxu0 0.0
    %124 = vmatpush1.msra.mxu0 %v101
    %125 = vmatprep.subr.mxu0 0.0
    %126 = vmatpush1.msra.mxu0 0.0
    %127 = vmatprep.subr.mxu0 0.0
    %128 = vmatpush1.msra.mxu0 0.0
    %129 = vmatprep.subr.mxu0 0.0
    %130 = vmatpush1.msra.mxu0 0.0
    %131 = vmatprep.subr.mxu0 0.0
    %132 = vmatpush1.msra.mxu0 0.0
    %133 = vmatprep.subr.mxu0 0.0
    %134 = vmatpush1.msra.mxu0 0.0
    %135 = vmatprep.subr.mxu0 0.0
    %136 = vmatpush1.msra.mxu0 0.0
    %137 = vmatprep.subr.mxu0 0.0
    %138 = vmatpush1.msra.mxu0 0.0
    %139 = vmatprep.subr.mxu0 0.0
    %140 = vmatpush1.msra.mxu0 0.0
    %141 = vmatprep.subr.mxu0 0.0
    %142 = vmatpush1.msra.mxu0 0.0
    %143 = vmatprep.subr.mxu0 0.0
    %144 = vmatpush1.msra.mxu0 0.0
    %145 = vmatprep.subr.mxu0 0.0
    %146 = vmatpush1.msra.mxu0 0.0
    %147 = vmatprep.subr.mxu0 0.0
    %148 = vmatpush1.msra.mxu0 0.0
    %149 = vmatprep.subr.mxu0 0.0
    %150 = vmatpush1.msra.mxu0 0.0
    %151 = vmatprep.subr.mxu0 0.0
    %152 = vmatpush1.msra.mxu0 0.0
    %153 = vmatprep.subr.mxu0 0.0
    %154 = vmatpush1.msra.mxu0 0.0
    %155 = vmatprep.subr.mxu0 0.0
    %156 = vmatpush1.msra.mxu0 0.0
    %157 = vmatprep.subr.mxu0 0.0
    %158 = vmatpush1.msra.mxu0 0.0
    %159 = vmatprep.subr.mxu0 0.0
    %160 = vmatpush1.msra.mxu0 0.0
    %161 = vmatprep.subr.mxu0 0.0
    %162 = vmatpush1.msra.mxu0 0.0
    %163 = vmatprep.subr.mxu0 0.0
    %164 = vmatpush1.msra.mxu0 0.0
    %165 = vmatprep.subr.mxu0 0.0
    %166 = vmatpush1.msra.mxu0 0.0
    %167 = vmatprep.subr.mxu0 0.0
    %168 = vmatpush1.msra.mxu0 0.0
    %169 = vmatprep.subr.mxu0 0.0
    %170 = vmatpush1.msra.mxu0 0.0
    %171 = vmatprep.subr.mxu0 0.0
    %172 = vmatpush1.msra.mxu0 0.0
    %173 = vmatprep.subr.mxu0 0.0
    %174 = vmatpush1.msra.mxu0 0.0
    %175 = vmatprep.subr.mxu0 0.0
    %176 = vmatpush1.msra.mxu0 0.0
    %177 = vmatprep.subr.mxu0 0.0
    %178 = vmatpush1.msra.mxu0 0.0
    %179 = vmatprep.subr.mxu0 0.0
    %180 = vmatpush1.msra.mxu0 0.0
    %181 = vmatprep.mubr.f32.mxu0 0.0
    %182 = vmatmul.mubr.f32.gmra.mrb[0].mxu0 %v115
    %v183 = vpop.f32.mrb[0].mxu0
    %v184 = vadd.f32 %v112, %v183
    %v185 = vpop.f32.mrb[0].mxu0
    %186 = vdwg.mxu0
    %187 = vst [vmem:[#allocation3] sm:$0x1] %v184
    // Predicated region
    $region22: #{tpu_custom_call.1} parent=1 // pred_check
      _
    $region23: #{tpu_custom_call.1} parent=1 // pred_check_branch
      %189 = sbr.rel (0) target = $region25
    $region24: #{tpu_custom_call.1} parent=1 // pred_region
      %s191 = ssub.s32 16, 16
      %192 = vsyncadd [#allocation4], %s191
      %s194 = sshll.u32 [#allocation3], 4
      %s195 = int_to_ptr.vmem [resolvable:$true] %s194
      %197 = dma.vmem_to_hbm [thread:$0]  %s195, 16, %s5, [#allocation4]
    $region25: #{tpu_custom_call.1} parent=1 // pred_fallthru
      _
    // Predicated region
    $region26: #{tpu_custom_call.1} parent=1 // pred_check
      _
    $region27: #{tpu_custom_call.1} parent=1 // pred_check_branch
      %199 = sbr.rel (0) target = $region29
    $region28: #{tpu_custom_call.1} parent=1 // pred_region
      %200 = dma.done [#allocation4], 16
    $region29: #{tpu_custom_call.1} parent=1 // pred_fallthru
      _
    %201 = vsyncpa [#allocation4], 1

</llo_original>
